<compile_context>
chip_gen: v5e
topology: v5e:2x2
jax: 0.10.0
libtpu: 0.0.40
codegen_flags: <defaults>
</compile_context>

<pallas_src>
import numpy as np
import jax
import jax.numpy as jnp
from jax.experimental import pallas as pl
from jax.experimental.pallas import tpu as pltpu


def _round_up(x, m):
    return ((x + m - 1) // m) * m


def _orthogonal(key, shape, gain):
    """Deterministic orthogonal init (mimics torch.nn.init.orthogonal_)."""
    rows, cols = shape
    n = max(rows, cols)
    a = jax.random.normal(key, (n, n), dtype=jnp.float32)
    q, r = jnp.linalg.qr(a)
    q = q * jnp.sign(jnp.diag(r))
    return gain * q[:rows, :cols]


def value_network_kernel(xt_ref, w1t_ref, b1_ref, w2_ref, b2_ref, o_ref):
    # Layer 1 on the MXU, transposed orientation:
    #   (HP, S) @ (S, TB) -> (HP, TB), f32 accumulation.
    z = jnp.dot(w1t_ref[...], xt_ref[...], preferred_element_type=jnp.float32)
    z = z + b1_ref[...]                      # b1 is an (HP, 1) column -> lane broadcast
    # tanh (EUP) and the w2 multiply (VPU) run in the compute dtype (bf16 on
    # the v6e/v7x fast path, f32 otherwise); accumulation stays f32.
    h = jnp.tanh(z.astype(w2_ref.dtype))
    # Layer 2: VPU multiply + cross-sublane reduce (XLU) -> lane-dense (1, TB)
    # row.  Keeps the 1-output-column work off the MXU/result-FIFO path.
    v = jnp.sum((h * w2_ref[...]).astype(jnp.float32), axis=0, keepdims=True)
    o_ref[...] = v + b2_ref[0, 0]            # b2 is an SMEM scalar


def _default_block_batch(batch, state_dim, hp, x_itemsize):
    # Per-batch-row VMEM cost of one grid step: double-buffered x^T tile,
    # double-buffered (1, TB) output row, and the f32 (HP, TB) hidden
    # intermediate (+ one temp).  Target ~12 MiB of working set so the
    # ~0.35 us per-step overhead is well amortized; cap at 8192 rows.
    per_row = (2 * _round_up(state_dim, 8) * x_itemsize   # x^T, double-buffered
               + 2 * 8 * 4                                # out row, double-buffered
               + 2 * hp * 4)                              # hidden intermediate(s), f32
    tb = (12 * 1024 * 1024) // per_row
    tb = max(128, min(8192, (tb // 128) * 128))
    pb128 = _round_up(batch, 128)
    if pb128 >= 256:
        # Guarantee >= 2 grid tiles so ("parallel",) shards across both
        # TensorCores on v7x (no-op on v5e/v6e).
        tb = min(tb, max(128, (pb128 // 2 // 128) * 128))
    return min(tb, pb128)


def value_network_forward(x, w1, b1, w2, b2, *, block_batch=None, compute_dtype=None):
    """value = tanh(x @ w1 + b1) @ w2 + b2, returns (batch, 1) float32.

    x: [batch, state_dim]; w1: [state_dim, hidden]; b1: [hidden]-like;
    w2: [hidden, 1] or [hidden]; b2: scalar-like.
    compute_dtype: dtype for the x/w1/w2 streams, the matmul operands and the
      tanh (e.g. jnp.bfloat16 on v6e/v7x).  Accumulation / reduce stay f32.
    """
    batch, state_dim = x.shape
    hidden = w1.shape[1]

    compute_dtype = jnp.dtype(x.dtype if compute_dtype is None else compute_dtype)
    x_itemsize = compute_dtype.itemsize

    # --- Hidden dim lives on the sublane axis now: pad only to a multiple of
    # 16 (bf16-safe).  Exact: tanh(0 + 0) = 0 and padded w2 entries are 0.
    hp = _round_up(max(hidden, 1), 16)
    pad_h = hp - hidden

    w1t = jnp.pad(jnp.asarray(w1).T.astype(compute_dtype), ((0, pad_h), (0, 0)))        # (HP, S)
    b1c = jnp.pad(jnp.asarray(b1, jnp.float32).reshape(hidden, 1), ((0, pad_h), (0, 0)))  # (HP, 1)
    w2c = jnp.pad(jnp.asarray(w2).reshape(hidden, 1).astype(compute_dtype),
                  ((0, pad_h), (0, 0)))                                                 # (HP, 1)
    b2s = jnp.asarray(b2, jnp.float32).reshape(1, 1)

    # --- Batch tiling (batch is the lane axis -> tiles are multiples of 128).
    if block_batch is None:
        tb = _default_block_batch(batch, state_dim, hp, x_itemsize)
    else:
        tb = max(128, _round_up(int(block_batch), 128))
    pb = _round_up(batch, tb)
    num_tiles = pb // tb

    # Transposed x stream: (state_dim, pb).  The wrapper transpose costs one
    # extra pass over x but buys lane-dense loads/stores and the smaller
    # hidden padding above; XLA will usually fuse it with x's producer.
    xt = jnp.pad(jnp.asarray(x).astype(compute_dtype), ((0, pb - batch), (0, 0))).T

    # --- VMEM budget -> explicit limit (headroom for v5e's 16 MiB default
    # scoped limit, stays well under v7x's 64 MiB physical VMEM).
    x_bytes = 2 * _round_up(state_dim, 8) * tb * x_itemsize     # double-buffered x^T
    o_bytes = 2 * 8 * tb * 4                                    # double-buffered out row
    h_bytes = 3 * hp * tb * 4                                   # hidden intermediates (f32)
    resident = 3 * hp * 128 * 4 + hp * 128 * x_itemsize         # w1t/b1/w2 (lane-padded)
    vmem_limit = int(min(48 << 20, max(24 << 20, 2 * (x_bytes + o_bytes + h_bytes + resident))))

    cost = pl.CostEstimate(
        flops=int(2 * pb * state_dim * hp + 3 * pb * hp),
        transcendentals=int(pb * hp),
        bytes_accessed=int(x_itemsize * pb * state_dim
                           + x_itemsize * hp * (state_dim + 1)
                           + 4 * (hp + 1)
                           + 4 * pb),
    )

    out = pl.pallas_call(
        value_network_kernel,
        out_shape=jax.ShapeDtypeStruct((1, pb), jnp.float32),
        grid=(num_tiles,),
        in_specs=[
            pl.BlockSpec((state_dim, tb), lambda i: (0, i)),     # x^T: streamed per tile
            pl.BlockSpec((hp, state_dim), lambda i: (0, 0)),     # w1^T: resident
            pl.BlockSpec((hp, 1), lambda i: (0, 0)),             # b1 column: resident
            pl.BlockSpec((hp, 1), lambda i: (0, 0)),             # w2 column: resident
            pl.BlockSpec(memory_space=pltpu.MemorySpace.SMEM),   # b2: scalar in SMEM
        ],
        out_specs=pl.BlockSpec((1, tb), lambda i: (0, i)),        # lane-dense output row
        compiler_params=pltpu.CompilerParams(
            dimension_semantics=("parallel",),
            vmem_limit_bytes=vmem_limit,
        ),
        cost_estimate=cost,
    )(xt, w1t, b1c, w2c, b2s)

    return out[0, :batch].reshape(batch, 1)


if __name__ == "__main__":
    # Small shapes implied by the module: batch of states, state_dim, hidden.
    batch, state_dim, hidden_size = 4, 8, 32

    key = jax.random.PRNGKey(0)
    k_x, k_w1, k_w2, k_x2, k_w1b, k_w2b = jax.random.split(key, 6)

    # Deterministic parameter init matching the module's __init__:
    #   fc1:      Linear(state_dim, hidden_size), orthogonal std=sqrt(2), bias=0
    #   fc_value: Linear(hidden_size, 1),         orthogonal std=1.0,     bias=0
    w1 = _orthogonal(k_w1, (state_dim, hidden_size), gain=float(np.sqrt(2)))
    b1 = jnp.zeros((hidden_size,), dtype=jnp.float32)
    w2 = _orthogonal(k_w2, (hidden_size, 1), gain=1.0)
    b2 = jnp.zeros((1,), dtype=jnp.float32)

    x = jax.random.normal(k_x, (batch, state_dim), dtype=jnp.float32)

    out = value_network_forward(x, w1, b1, w2, b2)
    jax.block_until_ready(out)
    ref = jnp.tanh(x @ w1 + b1) @ w2 + b2
    assert out.shape == (batch, 1)
    np.testing.assert_allclose(np.asarray(out), np.asarray(ref), rtol=1e-4, atol=1e-4)

    # Larger multi-tile case: exercises hidden padding (50 -> 64), batch
    # padding, and >= 2 grid tiles (v7x dual-TC path).
    batch2, sd2, hid2 = 1000, 12, 50
    w1b = _orthogonal(k_w1b, (sd2, hid2), gain=float(np.sqrt(2)))
    b1b = jnp.zeros((hid2,), dtype=jnp.float32)
    w2b = _orthogonal(k_w2b, (hid2, 1), gain=1.0)
    b2b = jnp.zeros((1,), dtype=jnp.float32)
    x2 = jax.random.normal(k_x2, (batch2, sd2), dtype=jnp.float32)

    out2 = value_network_forward(x2, w1b, b1b, w2b, b2b)
    jax.block_until_ready(out2)
    ref2 = jnp.tanh(x2 @ w1b + b1b) @ w2b + b2b
    np.testing.assert_allclose(np.asarray(out2), np.asarray(ref2), rtol=1e-4, atol=1e-4)

    # bf16 stream + bf16 tanh fast path (v6e/v7x); still correct everywhere.
    out_bf16 = value_network_forward(x, w1, b1, w2, b2, compute_dtype=jnp.bfloat16)
    jax.block_until_ready(out_bf16)
    np.testing.assert_allclose(np.asarray(out_bf16), np.asarray(ref), rtol=5e-2, atol=5e-2)

    print("KERNEL_OK")
</pallas_src>

<mosaic_0001>
module attributes {stable_mosaic.version = 11 : i64} {
  func.func @value_network_kernel(%arg0: i32, %arg1: memref<8x128xf32, #tpu.memory_space<vmem>>, %arg2: memref<32x8xf32, #tpu.memory_space<vmem>>, %arg3: memref<32x1xf32, #tpu.memory_space<vmem>>, %arg4: memref<32x1xf32, #tpu.memory_space<vmem>>, %arg5: memref<1x1xf32, #tpu.memory_space<smem>>, %arg6: memref<1x128xf32, #tpu.memory_space<vmem>>) attributes {dimension_semantics = [#tpu.dimension_semantics<parallel>], iteration_bounds = array<i64: 1>, scalar_prefetch = 0 : i64, scratch_operands = 0 : i64, tpu.core_type = #tpu.core_type<tc>, window_params = [{transform_indices = @transform_0, window_bounds = array<i64: 8, 128>}, {pipeline_mode = #tpu.pipeline_mode<synchronous>, transform_indices = @transform_1, window_bounds = array<i64: 32, 8>}, {pipeline_mode = #tpu.pipeline_mode<synchronous>, transform_indices = @transform_2, window_bounds = array<i64: 32, 1>}, {pipeline_mode = #tpu.pipeline_mode<synchronous>, transform_indices = @transform_3, window_bounds = array<i64: 32, 1>}, {transform_indices = @transform_4, window_bounds = array<i64: 1, 1>}, {transform_indices = @transform_5, window_bounds = array<i64: 1, 128>}]} {
    %c0 = arith.constant 0 : index
    %c0_0 = arith.constant 0 : index
    %0 = vector.load %arg2[%c0, %c0_0] : memref<32x8xf32, #tpu.memory_space<vmem>>, vector<32x8xf32>
    %c0_1 = arith.constant 0 : index
    %c0_2 = arith.constant 0 : index
    %1 = vector.load %arg1[%c0_1, %c0_2] : memref<8x128xf32, #tpu.memory_space<vmem>>, vector<8x128xf32>
    %cst = arith.constant dense<0.000000e+00> : vector<32x128xf32>
    %2 = tpu.matmul %0, %1, %cst {dimension_numbers = #tpu.dot_dimension_numbers<[1], [0], [0], [1], [0, 0, 1, 1], [], []>} : vector<32x8xf32>, vector<8x128xf32>, vector<32x128xf32> -> vector<32x128xf32>
    %c0_3 = arith.constant 0 : index
    %c0_4 = arith.constant 0 : index
    %3 = vector.load %arg3[%c0_3, %c0_4] : memref<32x1xf32, #tpu.memory_space<vmem>>, vector<32x1xf32>
    %4 = vector.broadcast %3 : vector<32x1xf32> to vector<32x128xf32>
    %5 = arith.addf %2, %4 : vector<32x128xf32>
    %6 = math.tanh %5 : vector<32x128xf32>
    %c0_5 = arith.constant 0 : index
    %c0_6 = arith.constant 0 : index
    %7 = vector.load %arg4[%c0_5, %c0_6] : memref<32x1xf32, #tpu.memory_space<vmem>>, vector<32x1xf32>
    %8 = vector.broadcast %7 : vector<32x1xf32> to vector<32x128xf32>
    %9 = arith.mulf %6, %8 : vector<32x128xf32>
    %cst_7 = arith.constant dense<0.000000e+00> : vector<128xf32>
    %10 = vector.multi_reduction <add>, %9, %cst_7 [0] : vector<32x128xf32> to vector<128xf32>
    %11 = vector.shape_cast %10 : vector<128xf32> to vector<1x128xf32>
    %c0_8 = arith.constant 0 : index
    %c0_9 = arith.constant 0 : index
    %12 = memref.load %arg5[%c0_8, %c0_9] : memref<1x1xf32, #tpu.memory_space<smem>>
    %13 = vector.broadcast %12 : f32 to vector<1x128xf32>
    %14 = arith.addf %11, %13 : vector<1x128xf32>
    %c0_10 = arith.constant 0 : index
    %c0_11 = arith.constant 0 : index
    %15 = vector.load %arg6[%c0_10, %c0_11] : memref<1x128xf32, #tpu.memory_space<vmem>>, vector<1x128xf32>
    tpu.vector_store %arg6[%c0_10, %c0_11], %14 {strides = array<i32>} : memref<1x128xf32, #tpu.memory_space<vmem>>, vector<1x128xf32>,
    return
  }
  func.func @transform_0(%arg0: i32) -> (i32, i32) {
    %c0_i32 = arith.constant 0 : i32
    %c0_i32_0 = arith.constant 0 : i32
    return %c0_i32, %arg0 : i32, i32
  }
  func.func @transform_1(%arg0: i32) -> (i32, i32) {
    %c0_i32 = arith.constant 0 : i32
    %c0_i32_0 = arith.constant 0 : i32
    %c0_i32_1 = arith.constant 0 : i32
    return %c0_i32, %c0_i32_0 : i32, i32
  }
  func.func @transform_2(%arg0: i32) -> (i32, i32) {
    %c0_i32 = arith.constant 0 : i32
    %c0_i32_0 = arith.constant 0 : i32
    %c0_i32_1 = arith.constant 0 : i32
    return %c0_i32, %c0_i32_0 : i32, i32
  }
  func.func @transform_3(%arg0: i32) -> (i32, i32) {
    %c0_i32 = arith.constant 0 : i32
    %c0_i32_0 = arith.constant 0 : i32
    %c0_i32_1 = arith.constant 0 : i32
    return %c0_i32, %c0_i32_0 : i32, i32
  }
  func.func @transform_4(%arg0: i32) -> (i32, i32) {
    %c0_i32 = arith.constant 0 : i32
    %c0_i32_0 = arith.constant 0 : i32
    %c0_i32_1 = arith.constant 0 : i32
    return %c0_i32, %c0_i32_0 : i32, i32
  }
  func.func @transform_5(%arg0: i32) -> (i32, i32) {
    %c0_i32 = arith.constant 0 : i32
    %c0_i32_0 = arith.constant 0 : i32
    return %c0_i32, %arg0 : i32, i32
  }
}

</mosaic_0001>

<llo_original>
// kernel: tpu_custom_call.1
$region0: #{tpu_custom_call.1}
  #allocation0 [shape = 'u32[]', space=smem, size = 0x4, offset = 0x4, fixed_abs, tag = 'smem constant byte address 0x4 - core index']
  #allocation1 [shape = 'u32[72,128]{1,0:T(1,128)}', space=vmem, size = 0x9000, scoped, tag = 'internal scratch']
  #allocation2 [shape = 'f32[1,1]{1,0:T(1,128)S(6)}', space=smem, size = 0x200, scoped, tag = 'scoped memory for tpu_custom_call.1']
  %s0 = inlined_call_operand.vmem [shape: f32[8,128], index: 0, kind: input, shape index: {}]
  %s1 = inlined_call_operand.vmem [shape: f32[32,8], index: 1, kind: input, shape index: {}]
  %s2 = inlined_call_operand.vmem [shape: f32[32,1], index: 2, kind: input, shape index: {}]
  %s3 = inlined_call_operand.vmem [shape: f32[32,1], index: 3, kind: input, shape index: {}]
  %s4 = inlined_call_operand.<no memory space> [shape: f32[1,1], index: 4, kind: input, shape index: {}]
  %s5 = inlined_call_operand.hbm [shape: f32[1,128], index: 5, kind: output, shape index: {}]
  %s6 = sld [smem:[#allocation0]]
  $region30: #{tpu_custom_call.1} parent=0
    _
  %s8 = ssub.s32 1, %s6
  %s9 = scalar_select 0, %s8, %s6
  %10 = sst [smem:[#allocation2]] %s4
  $region1: #{tpu_custom_call.1} parent=0
    #allocation3 [shape = 'u8[512]{0}', space=vmem, size = 0x400, scoped, tag = 'output window, operand 0, single buffered']
    #allocation4 [shape = 's32[1]{0}', space=sflag, size = 0x4, scoped, tag = 'scoped memory for tpu_custom_call.1']
    %11 = vsyncpa [#allocation4], 0
    // Predicated region
    $region2: #{tpu_custom_call.1} parent=1 // pred_check
      _
    $region3: #{tpu_custom_call.1} parent=1 // pred_check_branch
      %13 = sbr.rel (0) target = $region5
    $region4: #{tpu_custom_call.1} parent=1 // pred_region
      _
    $region5: #{tpu_custom_call.1} parent=1 // pred_fallthru
      _
    // Predicated region
    $region6: #{tpu_custom_call.1} parent=1 // pred_check
      _
    $region7: #{tpu_custom_call.1} parent=1 // pred_check_branch
      %15 = sbr.rel (0) target = $region9
    $region8: #{tpu_custom_call.1} parent=1 // pred_region
      _
    $region9: #{tpu_custom_call.1} parent=1 // pred_fallthru
      _
    // Predicated region
    $region10: #{tpu_custom_call.1} parent=1 // pred_check
      _
    $region11: #{tpu_custom_call.1} parent=1 // pred_check_branch
      %17 = sbr.rel (0) target = $region13
    $region12: #{tpu_custom_call.1} parent=1 // pred_region
      _
    $region13: #{tpu_custom_call.1} parent=1 // pred_fallthru
      _
    // Predicated region
    $region14: #{tpu_custom_call.1} parent=1 // pred_check
      _
    $region15: #{tpu_custom_call.1} parent=1 // pred_check_branch
      %19 = sbr.rel (0) target = $region17
    $region16: #{tpu_custom_call.1} parent=1 // pred_region
      _
    $region17: #{tpu_custom_call.1} parent=1 // pred_fallthru
      _
    // Predicated region
    $region18: #{tpu_custom_call.1} parent=1 // pred_check
      _
    $region19: #{tpu_custom_call.1} parent=1 // pred_check_branch
      %21 = sbr.rel (0) target = $region21
    $region20: #{tpu_custom_call.1} parent=1 // pred_region
      _
    $region21: #{tpu_custom_call.1} parent=1 // pred_fallthru
      _
    %v22 = vld [vmem:[%s1] sm:$0xff]
    %v23 = vld [vmem:[%s1 + $0x8] sm:$0xff]
    %v24 = vld [vmem:[%s1 + $0x10] sm:$0xff]
    %v25 = vld [vmem:[%s1 + $0x18] sm:$0xff]
    %v26 = vld [vmem:[%s0] sm:$0xff]
    %v27 = vld [vmem:[%s2] sm:$0xff]
    %v28 = vld [vmem:[%s2 + $0x8] sm:$0xff]
    %v29 = vld [vmem:[%s2 + $0x10] sm:$0xff]
    %v30 = vld [vmem:[%s2 + $0x18] sm:$0xff]
    %32 = vset.pattern.permute.xlu0 0
    %33 = vperm.xlu0 %32, %v27
    %v34 = vpop.permute.xlu0 %33
    %37 = vset.pattern.permute.xlu0 0
    %38 = vperm.xlu0 %37, %v28
    %v39 = vpop.permute.xlu0 %38
    %42 = vset.pattern.permute.xlu0 0
    %43 = vperm.xlu0 %42, %v29
    %v44 = vpop.permute.xlu0 %43
    %47 = vset.pattern.permute.xlu0 0
    %48 = vperm.xlu0 %47, %v30
    %v49 = vpop.permute.xlu0 %48
    %vm51 = vcmask 64512
    %v53 = vsel %vm51, %v22, 0
    %v56 = vsel %vm51, %v23, 0
    %v59 = vsel %vm51, %v24, 0
    %v62 = vsel %vm51, %v25, 0
    %64 = vmatpush.msra.mxu0 0.0
    %65 = vmatpush.msra.mxu0 0.0
    %66 = vmatpush.msra.mxu0 0.0
    %67 = vmatpush.msra.mxu0 0.0
    %68 = vmatpush.msra.mxu0 0.0
    %69 = vmatpush.msra.mxu0 0.0
    %70 = vmatpush.msra.mxu0 0.0
    %71 = vmatpush.msra.mxu0 0.0
    %72 = vmatpush.msra.mxu0 0.0
    %73 = vmatpush.msra.mxu0 0.0
    %74 = vmatpush.msra.mxu0 0.0
    %75 = vmatpush.msra.mxu0 0.0
    %76 = vmatpush.msra.mxu0 0.0
    %77 = vmatpush.msra.mxu0 0.0
    %78 = vmatpush.msra.mxu0 0.0
    %79 = vmatpush.msra.mxu0 %v26
    %80 = vmatmul.f32.gmra.mxu0 %v53
    %v81 = vpop.f32.mrf.mxu0
    %v82 = vadd.f32 %v34, %v81
    %83 = vmatmul.f32.gmra.mxu0 %v56
    %v84 = vpop.f32.mrf.mxu0
    %v85 = vadd.f32 %v39, %v84
    %86 = vmatmul.f32.gmra.mxu0 %v59
    %v87 = vpop.f32.mrf.mxu0
    %v88 = vadd.f32 %v44, %v87
    %89 = vmatmul.f32.gmra.mxu0 %v62
    %v90 = vpop.f32.mrf.mxu0
    %v91 = vadd.f32 %v49, %v90
    %92 = vdwg.mxu0
    %v93 = vtanh.pop %v82
    %v94 = vtanh.pop %v85
    %v95 = vtanh.pop %v88
    %v96 = vtanh.pop %v91
    %v97 = vld [vmem:[%s3] sm:$0xff]
    %v98 = vld [vmem:[%s3 + $0x8] sm:$0xff]
    %v99 = vld [vmem:[%s3 + $0x10] sm:$0xff]
    %v100 = vld [vmem:[%s3 + $0x18] sm:$0xff]
    %102 = vset.pattern.permute.xlu0 0
    %103 = vperm.xlu0 %102, %v97
    %v104 = vpop.permute.xlu0 %103
    %107 = vset.pattern.permute.xlu0 0
    %108 = vperm.xlu0 %107, %v98
    %v109 = vpop.permute.xlu0 %108
    %112 = vset.pattern.permute.xlu0 0
    %113 = vperm.xlu0 %112, %v99
    %v114 = vpop.permute.xlu0 %113
    %117 = vset.pattern.permute.xlu0 0
    %118 = vperm.xlu0 %117, %v100
    %v119 = vpop.permute.xlu0 %118
    %v121 = vmul.f32 %v93, %v104
    %v122 = vmul.f32 %v94, %v109
    %v123 = vmul.f32 %v95, %v114
    %v124 = vmul.f32 %v96, %v119
    %v125 = vadd.f32 %v121, %v122
    %v126 = vadd.f32 %v125, %v123
    %v127 = vadd.f32 %v126, %v124
    %v128 = vrot.slane %v127, 4
    %v129 = vadd.f32 %v127, %v128
    %v130 = vrot.slane %v129, 2
    %v131 = vadd.f32 %v129, %v130
    %v132 = vrot.slane %v131, 1
    %v133 = vadd.f32 %v131, %v132
    %s134 = sld [smem:[#allocation2]]
    %v135 = vstv %s134
    %v136 = vadd.f32 %v133, %v135
    %137 = vst [vmem:[#allocation3] sm:$0x1] %v136
    // Predicated region
    $region22: #{tpu_custom_call.1} parent=1 // pred_check
      _
    $region23: #{tpu_custom_call.1} parent=1 // pred_check_branch
      %139 = sbr.rel (0) target = $region25
    $region24: #{tpu_custom_call.1} parent=1 // pred_region
      %141 = vsyncadd [#allocation4], 0
      %s143 = sshll.u32 [#allocation3], 4
      %s144 = int_to_ptr.vmem [resolvable:$true] %s143
      %s145 = sshll.u32 %s5, 4
      %s146 = int_to_ptr.hbm [resolvable:$true] %s145
      %148 = dma.vmem_to_hbm [thread:$0]  %s144, 16, %s146, [#allocation4]
    $region25: #{tpu_custom_call.1} parent=1 // pred_fallthru
      _
    // Predicated region
    $region26: #{tpu_custom_call.1} parent=1 // pred_check
      _
    $region27: #{tpu_custom_call.1} parent=1 // pred_check_branch
      %150 = sbr.rel (0) target = $region29
    $region28: #{tpu_custom_call.1} parent=1 // pred_region
      %152 = dma.done [#allocation4], 16
    $region29: #{tpu_custom_call.1} parent=1 // pred_fallthru
      _
    %153 = vsyncpa [#allocation4], 1

</llo_original>
